<compile_context>
chip_gen: v5e
topology: v5e:2x2
jax: 0.10.0
libtpu: 0.0.40
codegen_flags: <defaults>
</compile_context>

<pallas_src>
import functools

import numpy as np
import jax
import jax.numpy as jnp
from jax import lax
from jax.experimental import pallas as pl
from jax.experimental.pallas import tpu as pltpu

POS_THRESHOLD = 0.7
NEG_THRESHOLD = 0.3

_MAX_TILE_N = 4096   # lane-tile cap (multiple of 512); blocks stay tiny vs VMEM
_CHUNK = 512         # lanes per inner chunk (keeps the IoU tile vreg-resident)


def _round_up(x, m):
    return ((x + m - 1) // m) * m


def _choose_tiling(n):
    """Pick (tn, chunk, n_pad).

    One fat lane tile per image whenever it fits (no artificial split: v5e/v6e
    are single-TC, and per-grid-step overhead is ~0.35 us).  tn is always a
    multiple of chunk, chunk a multiple of 128."""
    n128 = max(128, _round_up(n, 128))
    if n128 <= _CHUNK:
        tn, chunk = n128, n128                       # single tile, single chunk
    else:
        tn = min(_round_up(n128, _CHUNK), _MAX_TILE_N)
        chunk = _CHUNK
    n_pad = _round_up(n128, tn)
    return tn, chunk, n_pad


def _assign_kernel(gt_ref, pred_ref, mask_ref, pmax_ref, targ_ref, tval_ref,
                   *, pos_threshold, tn, chunk):
    """One (batch b, lane-tile j) grid step.

    gt_ref   : (1, Gp, 5)  precomputed GT x1,y1,x2,y2,area (resident across j)
    pred_ref : (1, 4, tn)  predictions, coordinate-major, cxcywh
    mask_ref : (1, Gp, tn) int8   exact (inter > thr * union)
    pmax_ref : (1, 1, tn)  f32    per-prediction max IoU over GT
    targ_ref : (1, 1, Gp, 1) i32  per-GT argmax (global pred index) in this tile
    tval_ref : (1, 1, Gp, 1) f32  per-GT max IoU in this tile
    """
    j = pl.program_id(1)

    gt = gt_ref[...][0]                               # (Gp, 5), conversion hoisted out
    gx1, gy1 = gt[:, 0:1], gt[:, 1:2]
    gx2, gy2 = gt[:, 2:3], gt[:, 3:4]
    area_g = gt[:, 4:5]
    gp = gt.shape[0]

    n_chunks = tn // chunk
    col = lax.broadcasted_iota(jnp.int32, (1, chunk), 1)   # single-row iota

    def body(c, carry):
        best_val, best_idx = carry                     # (Gp,1) f32 / (Gp,1) i32
        off = pl.multiple_of(c * chunk, chunk)

        pred = pred_ref[:, :, pl.ds(off, chunk)][0]    # (4, chunk) cxcywh
        pcx, pcy, pw, ph = pred[0:1, :], pred[1:2, :], pred[2:3, :], pred[3:4, :]
        px1, py1 = pcx - 0.5 * pw, pcy - 0.5 * ph
        px2, py2 = pcx + 0.5 * pw, pcy + 0.5 * ph
        area_p = (px2 - px1) * (py2 - py1)             # (1, chunk)

        iw = jnp.maximum(jnp.minimum(gx2, px2) - jnp.maximum(gx1, px1), 0.0)
        ih = jnp.maximum(jnp.minimum(gy2, py2) - jnp.maximum(gy1, py1), 0.0)
        inter = iw * ih                                # (Gp, chunk), vreg-resident
        union = area_g + area_p - inter                # torchvision box_iou: no eps

        # Exact positive mask on VALU: iou > thr  <=>  inter > thr * union.
        mask_ref[:, :, pl.ds(off, chunk)] = (
            inter > pos_threshold * union).astype(jnp.int8)[None]

        # IoU values (per-pred max / per-GT argmax only): EUP approx reciprocal.
        iou = inter * pl.reciprocal(union, approx=True)

        # Per-prediction max over GT (lanes are disjoint across chunks).
        pmax_ref[:, :, pl.ds(off, chunk)] = jnp.max(iou, axis=0, keepdims=True)[None]

        # Per-GT best within this chunk; min index among ties -> first occurrence.
        cmax = jnp.max(iou, axis=1, keepdims=True)                       # (Gp, 1)
        cfirst = jnp.min(jnp.where(iou == cmax, col, chunk),
                         axis=1, keepdims=True)                          # (Gp, 1)
        cidx = cfirst + off + j * tn
        take = cmax > best_val                         # strict > keeps earlier chunk
        best_val = jnp.where(take, cmax, best_val)
        best_idx = jnp.where(take, cidx, best_idx)
        return best_val, best_idx

    init = (jnp.full((gp, 1), -jnp.inf, jnp.float32),
            jnp.zeros((gp, 1), jnp.int32))
    best_val, best_idx = lax.fori_loop(0, n_chunks, body, init, unroll=True)

    targ_ref[...] = best_idx[None, None]
    tval_ref[...] = best_val[None, None]


@functools.partial(jax.jit, static_argnames=("pos_threshold",))
def _assign_device(gt_cxcywh, pred_cxcywh, pos_threshold=POS_THRESHOLD):
    """Batched device path.

    gt_cxcywh  : (B, Gp, 4) padded GT boxes (padded rows = far-away unit boxes).
    pred_cxcywh: (B, N, 4)  predicted boxes (cxcywh).
    Returns (pos_mask[B,Gp,N] int8, pred_max_iou[B,N] f32, gt_argmax[B,Gp] int32).
    """
    B, g_pad, _ = gt_cxcywh.shape
    _, n, _ = pred_cxcywh.shape
    tn, chunk, n_pad = _choose_tiling(n)
    n_tiles = n_pad // tn

    # GT cxcywh -> xyxy + area, hoisted out of the per-tile kernel body.
    gcx, gcy, gw, gh = (gt_cxcywh[..., k] for k in range(4))
    gx1, gy1 = gcx - 0.5 * gw, gcy - 0.5 * gh
    gx2, gy2 = gcx + 0.5 * gw, gcy + 0.5 * gh
    gt_feat = jnp.stack([gx1, gy1, gx2, gy2, (gx2 - gx1) * (gy2 - gy1)], axis=-1)

    # Predictions coordinate-major (prediction index -> lanes), zero-padded.
    # Padded prediction columns have zero area -> IoU 0 against every GT row.
    pred_t = jnp.transpose(pred_cxcywh, (0, 2, 1))
    pred_t = jnp.pad(pred_t, ((0, 0), (0, 0), (0, n_pad - n)))

    kernel = functools.partial(_assign_kernel, pos_threshold=pos_threshold,
                               tn=tn, chunk=chunk)
    mask, pmax, targ, tval = pl.pallas_call(
        kernel,
        out_shape=(
            jax.ShapeDtypeStruct((B, g_pad, n_pad), jnp.int8),
            jax.ShapeDtypeStruct((B, 1, n_pad), jnp.float32),
            jax.ShapeDtypeStruct((B, n_tiles, g_pad, 1), jnp.int32),
            jax.ShapeDtypeStruct((B, n_tiles, g_pad, 1), jnp.float32),
        ),
        grid=(B, n_tiles),
        in_specs=[
            pl.BlockSpec((1, g_pad, 5), lambda b, j: (b, 0, 0)),
            pl.BlockSpec((1, 4, tn), lambda b, j: (b, 0, j)),
        ],
        out_specs=(
            pl.BlockSpec((1, g_pad, tn), lambda b, j: (b, 0, j)),
            pl.BlockSpec((1, 1, tn), lambda b, j: (b, 0, j)),
            pl.BlockSpec((1, 1, g_pad, 1), lambda b, j: (b, j, 0, 0)),
            pl.BlockSpec((1, 1, g_pad, 1), lambda b, j: (b, j, 0, 0)),
        ),
        compiler_params=pltpu.CompilerParams(
            dimension_semantics=("parallel", "parallel")),
    )(gt_feat, pred_t)

    # Combine per-tile argmax -> global per-GT argmax (jnp.argmax keeps the first
    # tile on ties, preserving torch.argmax first-occurrence semantics).
    tval = tval[..., 0]                                   # (B, n_tiles, Gp)
    targ = targ[..., 0]
    best_tile = jnp.argmax(tval, axis=1)                  # (B, Gp)
    gt_argmax = jnp.take_along_axis(targ, best_tile[:, None, :], axis=1)[:, 0, :]
    return mask[:, :, :n], pmax[:, 0, :n], gt_argmax


def faster_rcnn_forward(outputs, targets,
                        pos_threshold=POS_THRESHOLD,
                        neg_threshold=NEG_THRESHOLD):
    """Mirror of FasterRCNN.forward (no parameters, @torch.no_grad).

    IoU, thresholding mask, per-pred max and per-GT argmax run on TPU in one
    batched Pallas call; only the ragged pos/neg index-list construction is
    host-side numpy (same semantics as the torch.where / set-dedup loop)."""
    pred_boxes = jnp.asarray(outputs['pred_boxes'], jnp.float32)
    B, n, _ = pred_boxes.shape
    gt_list = [np.asarray(jax.device_get(t['boxes']), np.float32).reshape(-1, 4)
               for t in targets]

    g_max = max([g.shape[0] for g in gt_list] + [1])
    g_pad = _round_up(g_max, 32)          # bucket Gp (int8 tiling needs 32 sublanes)

    # Padded GT rows: far-away unit boxes -> IoU exactly 0 against every real (or
    # zero-area) prediction; they never NaN and never affect maxima / argmax.
    gt_np = np.empty((B, g_pad, 4), np.float32)
    gt_np[..., 0:2] = -1e4
    gt_np[..., 2:4] = 1.0
    for b, g in enumerate(gt_list):
        gt_np[b, :g.shape[0]] = g

    pos_mask, pred_max, gt_argmax = _assign_device(
        jnp.asarray(gt_np), pred_boxes, pos_threshold=pos_threshold)
    # Single device->host transfer for the whole batch.
    pos_mask, pred_max, gt_argmax = jax.device_get((pos_mask, pred_max, gt_argmax))

    pos_indices, neg_indices = [], []
    for b in range(B):
        g = gt_list[b].shape[0]
        if g == 0:
            pos_indices.append((np.zeros((0,), np.int64), np.zeros((0,), np.int64)))
            neg_indices.append(np.arange(n, dtype=np.int64))
            continue
        neg_indices.append(np.where(pred_max[b] < neg_threshold)[0].astype(np.int64))

        # TODO(synk): ragged per-GT positive index lists (set dedup) have no dense
        # Pallas form; built host-side from the kernel's int8 mask / argmax outputs.
        idx_pred, idx_gt = [], []
        for i in range(g):
            pos_index = set(np.where(pos_mask[b, i] != 0)[0].tolist())
            pos_index.add(int(gt_argmax[b, i]))
            idx_pred += list(pos_index)
            idx_gt += [i] * len(pos_index)
        pos_indices.append((np.asarray(idx_pred, dtype=np.int64),
                            np.asarray(idx_gt, dtype=np.int64)))
    return pos_indices, neg_indices


def _ref_iou(gt, pred):
    gt = np.asarray(gt, np.float64)
    pred = np.asarray(pred, np.float64)

    def to_xyxy(b):
        cx, cy, w, h = b[:, 0], b[:, 1], b[:, 2], b[:, 3]
        return np.stack([cx - w / 2, cy - h / 2, cx + w / 2, cy + h / 2], -1)

    g, p = to_xyxy(gt), to_xyxy(pred)
    ag = (g[:, 2] - g[:, 0]) * (g[:, 3] - g[:, 1])
    ap = (p[:, 2] - p[:, 0]) * (p[:, 3] - p[:, 1])
    lt = np.maximum(g[:, None, :2], p[None, :, :2])
    rb = np.minimum(g[:, None, 2:], p[None, :, 2:])
    wh = np.clip(rb - lt, 0.0, None)
    inter = wh[..., 0] * wh[..., 1]
    return inter / (ag[:, None] + ap[None, :] - inter)


if __name__ == "__main__":
    key = jax.random.PRNGKey(0)
    B, N = 2, 256
    k1, k2, k3, k4 = jax.random.split(key, 4)

    cxcy = jax.random.uniform(k1, (B, N, 2), minval=0.2, maxval=0.8)
    wh = jax.random.uniform(k2, (B, N, 2), minval=0.05, maxval=0.3)
    pred_boxes = jnp.concatenate([cxcy, wh], axis=-1)   # (B, N, 4) cxcywh

    # GT boxes: jittered copies of a few predictions so IoU > 0.7 matches exist.
    gt0 = pred_boxes[0, :3] + 0.01 * jax.random.normal(k3, (3, 4))
    gt1 = pred_boxes[1, :5] + 0.01 * jax.random.normal(k4, (5, 4))
    targets = [{'boxes': gt0}, {'boxes': gt1}]
    outputs = {'pred_boxes': pred_boxes}

    pos_indices, neg_indices = faster_rcnn_forward(outputs, targets)

    # ---- validate the device path against a float64 numpy reference ----------
    TOL = 1e-2   # budget for the approx (EUP) reciprocal on the value path; the
                 # positive mask itself is exact (inter > thr * union)
    gt_list = [np.asarray(jax.device_get(t['boxes']), np.float32) for t in targets]
    g_pad = 32
    gt_pad = np.empty((B, g_pad, 4), np.float32)
    gt_pad[..., 0:2] = -1e4
    gt_pad[..., 2:4] = 1.0
    for b, g in enumerate(gt_list):
        gt_pad[b, :g.shape[0]] = g

    dev_out = _assign_device(jnp.asarray(gt_pad), pred_boxes)
    jax.block_until_ready(dev_out)
    pos_mask, pred_max, gt_argmax = jax.device_get(dev_out)
    pred_np = np.asarray(jax.device_get(pred_boxes))

    for b in range(B):
        g = gt_list[b].shape[0]
        ref = _ref_iou(gt_list[b], pred_np[b])

        # per-prediction max over GT (input to the negative mask)
        assert np.allclose(pred_max[b], ref.max(axis=0), atol=TOL), "max-IoU mismatch"

        # per-GT argmax: must be value-equivalent to the reference argmax
        for i in range(g):
            a = int(gt_argmax[b, i])
            assert 0 <= a < N, "argmax index out of range"
            assert ref[i, a] >= ref[i].max() - TOL, "argmax mismatch"

        # positive mask must agree with the reference away from the threshold band
        ref_mask = ref > POS_THRESHOLD
        decided = np.abs(ref - POS_THRESHOLD) > TOL
        assert np.array_equal((pos_mask[b, :g] != 0) & decided, ref_mask & decided), \
            "pos-mask mismatch"

        # negative indices: correct away from the threshold band
        ref_max = ref.max(axis=0)
        got_neg = set(neg_indices[b].tolist())
        must_neg = set(np.where(ref_max < NEG_THRESHOLD - TOL)[0].tolist())
        may_neg = set(np.where(ref_max < NEG_THRESHOLD + TOL)[0].tolist())
        assert must_neg.issubset(got_neg) and got_neg.issubset(may_neg), \
            "neg-indices mismatch"

    assert len(pos_indices) == B and len(neg_indices) == B
    assert all(len(pos_indices[b][0]) >= gt_list[b].shape[0] for b in range(B)), \
        "missing per-GT argmax match"
    print("KERNEL_OK")
</pallas_src>

<mosaic_0001>
module attributes {stable_mosaic.version = 11 : i64} {
  func.func @_assign_kernel(%arg0: i32, %arg1: i32, %arg2: memref<1x32x5xf32, #tpu.memory_space<vmem>>, %arg3: memref<1x4x256xf32, #tpu.memory_space<vmem>>, %arg4: memref<1x32x256xi8, #tpu.memory_space<vmem>>, %arg5: memref<1x1x256xf32, #tpu.memory_space<vmem>>, %arg6: memref<1x1x32x1xi32, #tpu.memory_space<vmem>>, %arg7: memref<1x1x32x1xf32, #tpu.memory_space<vmem>>) attributes {dimension_semantics = [#tpu.dimension_semantics<parallel>, #tpu.dimension_semantics<parallel>], iteration_bounds = array<i64: 2, 1>, scalar_prefetch = 0 : i64, scratch_operands = 0 : i64, tpu.core_type = #tpu.core_type<tc>, window_params = [{transform_indices = @transform_0, window_bounds = array<i64: 1, 32, 5>}, {transform_indices = @transform_1, window_bounds = array<i64: 1, 4, 256>}, {transform_indices = @transform_2, window_bounds = array<i64: 1, 32, 256>}, {transform_indices = @transform_3, window_bounds = array<i64: 1, 1, 256>}, {transform_indices = @transform_4, window_bounds = array<i64: 1, 1, 32, 1>}, {transform_indices = @transform_5, window_bounds = array<i64: 1, 1, 32, 1>}]} {
    %c0 = arith.constant 0 : index
    %c0_0 = arith.constant 0 : index
    %c0_1 = arith.constant 0 : index
    %0 = vector.load %arg2[%c0, %c0_0, %c0_1] : memref<1x32x5xf32, #tpu.memory_space<vmem>>, vector<1x32x5xf32>
    %1 = vector.shape_cast %0 : vector<1x32x5xf32> to vector<32x5xf32>
    %2 = vector.extract_strided_slice %1 {offsets = [0, 0], sizes = [32, 1], strides = [1, 1]} : vector<32x5xf32> to vector<32x1xf32>
    %3 = vector.extract_strided_slice %1 {offsets = [0, 1], sizes = [32, 1], strides = [1, 1]} : vector<32x5xf32> to vector<32x1xf32>
    %4 = vector.extract_strided_slice %1 {offsets = [0, 2], sizes = [32, 1], strides = [1, 1]} : vector<32x5xf32> to vector<32x1xf32>
    %5 = vector.extract_strided_slice %1 {offsets = [0, 3], sizes = [32, 1], strides = [1, 1]} : vector<32x5xf32> to vector<32x1xf32>
    %6 = vector.extract_strided_slice %1 {offsets = [0, 4], sizes = [32, 1], strides = [1, 1]} : vector<32x5xf32> to vector<32x1xf32>
    %7 = tpu.iota {dimensions = array<i32: 1>} : vector<1x256xi32>
    %cst = arith.constant 0xFF800000 : f32
    %8 = vector.broadcast %cst : f32 to vector<32x1xf32>
    %c0_i32 = arith.constant 0 : i32
    %9 = vector.broadcast %c0_i32 : i32 to vector<32x1xi32>
    %c0_i32_2 = arith.constant 0 : i32
    %c256_i32 = arith.constant 256 : i32
    %10 = arith.muli %c0_i32_2, %c256_i32 : i32
    %11 = tpu.assume_multiple %10, 256 : i32
    %c0_3 = arith.constant 0 : index
    %c0_4 = arith.constant 0 : index
    %12 = arith.index_cast %11 : i32 to index
    %13 = vector.load %arg3[%c0_3, %c0_4, %12] : memref<1x4x256xf32, #tpu.memory_space<vmem>>, vector<1x4x256xf32>
    %14 = vector.shape_cast %13 : vector<1x4x256xf32> to vector<4x256xf32>
    %15 = vector.extract_strided_slice %14 {offsets = [0, 0], sizes = [1, 256], strides = [1, 1]} : vector<4x256xf32> to vector<1x256xf32>
    %16 = vector.extract_strided_slice %14 {offsets = [1, 0], sizes = [1, 256], strides = [1, 1]} : vector<4x256xf32> to vector<1x256xf32>
    %17 = vector.extract_strided_slice %14 {offsets = [2, 0], sizes = [1, 256], strides = [1, 1]} : vector<4x256xf32> to vector<1x256xf32>
    %18 = vector.extract_strided_slice %14 {offsets = [3, 0], sizes = [1, 256], strides = [1, 1]} : vector<4x256xf32> to vector<1x256xf32>
    %cst_5 = arith.constant 5.000000e-01 : f32
    %19 = vector.broadcast %cst_5 : f32 to vector<1x256xf32>
    %20 = arith.mulf %19, %17 : vector<1x256xf32>
    %21 = arith.subf %15, %20 : vector<1x256xf32>
    %cst_6 = arith.constant 5.000000e-01 : f32
    %22 = vector.broadcast %cst_6 : f32 to vector<1x256xf32>
    %23 = arith.mulf %22, %18 : vector<1x256xf32>
    %24 = arith.subf %16, %23 : vector<1x256xf32>
    %cst_7 = arith.constant 5.000000e-01 : f32
    %25 = vector.broadcast %cst_7 : f32 to vector<1x256xf32>
    %26 = arith.mulf %25, %17 : vector<1x256xf32>
    %27 = arith.addf %15, %26 : vector<1x256xf32>
    %cst_8 = arith.constant 5.000000e-01 : f32
    %28 = vector.broadcast %cst_8 : f32 to vector<1x256xf32>
    %29 = arith.mulf %28, %18 : vector<1x256xf32>
    %30 = arith.addf %16, %29 : vector<1x256xf32>
    %31 = arith.subf %27, %21 : vector<1x256xf32>
    %32 = arith.subf %30, %24 : vector<1x256xf32>
    %33 = arith.mulf %31, %32 : vector<1x256xf32>
    %34 = vector.broadcast %4 : vector<32x1xf32> to vector<32x256xf32>
    %35 = vector.broadcast %27 : vector<1x256xf32> to vector<32x256xf32>
    %36 = arith.minimumf %34, %35 : vector<32x256xf32>
    %37 = vector.broadcast %2 : vector<32x1xf32> to vector<32x256xf32>
    %38 = vector.broadcast %21 : vector<1x256xf32> to vector<32x256xf32>
    %39 = arith.maximumf %37, %38 : vector<32x256xf32>
    %40 = arith.subf %36, %39 : vector<32x256xf32>
    %cst_9 = arith.constant 0.000000e+00 : f32
    %41 = vector.broadcast %cst_9 : f32 to vector<32x256xf32>
    %42 = arith.maximumf %40, %41 : vector<32x256xf32>
    %43 = vector.broadcast %5 : vector<32x1xf32> to vector<32x256xf32>
    %44 = vector.broadcast %30 : vector<1x256xf32> to vector<32x256xf32>
    %45 = arith.minimumf %43, %44 : vector<32x256xf32>
    %46 = vector.broadcast %3 : vector<32x1xf32> to vector<32x256xf32>
    %47 = vector.broadcast %24 : vector<1x256xf32> to vector<32x256xf32>
    %48 = arith.maximumf %46, %47 : vector<32x256xf32>
    %49 = arith.subf %45, %48 : vector<32x256xf32>
    %cst_10 = arith.constant 0.000000e+00 : f32
    %50 = vector.broadcast %cst_10 : f32 to vector<32x256xf32>
    %51 = arith.maximumf %49, %50 : vector<32x256xf32>
    %52 = arith.mulf %42, %51 : vector<32x256xf32>
    %53 = vector.broadcast %6 : vector<32x1xf32> to vector<32x256xf32>
    %54 = vector.broadcast %33 : vector<1x256xf32> to vector<32x256xf32>
    %55 = arith.addf %53, %54 : vector<32x256xf32>
    %56 = arith.subf %55, %52 : vector<32x256xf32>
    %cst_11 = arith.constant 0.699999988 : f32
    %57 = vector.broadcast %cst_11 : f32 to vector<32x256xf32>
    %58 = arith.mulf %57, %56 : vector<32x256xf32>
    %59 = arith.cmpf ogt, %52, %58 : vector<32x256xf32>
    %60 = arith.extui %59 : vector<32x256xi1> to vector<32x256xi8>
    %61 = vector.shape_cast %60 : vector<32x256xi8> to vector<1x32x256xi8>
    %c0_12 = arith.constant 0 : index
    %c0_13 = arith.constant 0 : index
    %62 = arith.index_cast %11 : i32 to index
    %63 = vector.load %arg4[%c0_12, %c0_13, %62] : memref<1x32x256xi8, #tpu.memory_space<vmem>>, vector<1x32x256xi8>
    tpu.vector_store %arg4[%c0_12, %c0_13, %62], %61 {strides = array<i32>} : memref<1x32x256xi8, #tpu.memory_space<vmem>>, vector<1x32x256xi8>,
    %64 = tpu.reciprocal %56 {approx = true} : vector<32x256xf32> -> vector<32x256xf32>
    %65 = arith.mulf %52, %64 : vector<32x256xf32>
    %cst_14 = arith.constant dense<0xFF800000> : vector<256xf32>
    %66 = vector.multi_reduction <maximumf>, %65, %cst_14 [0] : vector<32x256xf32> to vector<256xf32>
    %67 = vector.shape_cast %66 : vector<256xf32> to vector<1x256xf32>
    %68 = vector.shape_cast %67 : vector<1x256xf32> to vector<1x1x256xf32>
    %c0_15 = arith.constant 0 : index
    %c0_16 = arith.constant 0 : index
    %69 = arith.index_cast %11 : i32 to index
    %70 = vector.load %arg5[%c0_15, %c0_16, %69] : memref<1x1x256xf32, #tpu.memory_space<vmem>>, vector<1x1x256xf32>
    tpu.vector_store %arg5[%c0_15, %c0_16, %69], %68 {strides = array<i32>} : memref<1x1x256xf32, #tpu.memory_space<vmem>>, vector<1x1x256xf32>,
    %cst_17 = arith.constant dense<0xFF800000> : vector<32xf32>
    %71 = vector.multi_reduction <maximumf>, %65, %cst_17 [1] : vector<32x256xf32> to vector<32xf32>
    %72 = vector.shape_cast %71 : vector<32xf32> to vector<32x1xf32>
    %73 = vector.broadcast %72 : vector<32x1xf32> to vector<32x256xf32>
    %74 = arith.cmpf oeq, %65, %73 : vector<32x256xf32>
    %c256_i32_18 = arith.constant 256 : i32
    %75 = vector.shape_cast %7 : vector<1x256xi32> to vector<1x256xi32>
    %76 = vector.broadcast %75 : vector<1x256xi32> to vector<32x256xi32>
    %77 = vector.broadcast %c256_i32_18 : i32 to vector<32x256xi32>
    %78 = arith.select %74, %76, %77 : vector<32x256xi1>, vector<32x256xi32>
    %cst_19 = arith.constant dense<2147483647> : vector<32xi32>
    %79 = vector.multi_reduction <minsi>, %78, %cst_19 [1] : vector<32x256xi32> to vector<32xi32>
    %80 = vector.shape_cast %79 : vector<32xi32> to vector<32x1xi32>
    %81 = vector.broadcast %11 : i32 to vector<32x1xi32>
    %82 = arith.addi %80, %81 : vector<32x1xi32>
    %c256_i32_20 = arith.constant 256 : i32
    %83 = arith.muli %arg1, %c256_i32_20 : i32
    %84 = vector.broadcast %83 : i32 to vector<32x1xi32>
    %85 = arith.addi %82, %84 : vector<32x1xi32>
    %86 = arith.cmpf ogt, %72, %8 : vector<32x1xf32>
    %87 = arith.select %86, %72, %8 : vector<32x1xi1>, vector<32x1xf32>
    %88 = arith.select %86, %85, %9 : vector<32x1xi1>, vector<32x1xi32>
    %c1_i32 = arith.constant 1 : i32
    %89 = vector.shape_cast %88 : vector<32x1xi32> to vector<1x1x32x1xi32>
    %c0_21 = arith.constant 0 : index
    %c0_22 = arith.constant 0 : index
    %c0_23 = arith.constant 0 : index
    %c0_24 = arith.constant 0 : index
    %90 = vector.load %arg6[%c0_21, %c0_22, %c0_23, %c0_24] : memref<1x1x32x1xi32, #tpu.memory_space<vmem>>, vector<1x1x32x1xi32>
    tpu.vector_store %arg6[%c0_21, %c0_22, %c0_23, %c0_24], %89 {strides = array<i32>} : memref<1x1x32x1xi32, #tpu.memory_space<vmem>>, vector<1x1x32x1xi32>,
    %91 = vector.shape_cast %87 : vector<32x1xf32> to vector<1x1x32x1xf32>
    %c0_25 = arith.constant 0 : index
    %c0_26 = arith.constant 0 : index
    %c0_27 = arith.constant 0 : index
    %c0_28 = arith.constant 0 : index
    %92 = vector.load %arg7[%c0_25, %c0_26, %c0_27, %c0_28] : memref<1x1x32x1xf32, #tpu.memory_space<vmem>>, vector<1x1x32x1xf32>
    tpu.vector_store %arg7[%c0_25, %c0_26, %c0_27, %c0_28], %91 {strides = array<i32>} : memref<1x1x32x1xf32, #tpu.memory_space<vmem>>, vector<1x1x32x1xf32>,
    return
  }
  func.func @transform_0(%arg0: i32, %arg1: i32) -> (i32, i32, i32) {
    %c0_i32 = arith.constant 0 : i32
    %c0_i32_0 = arith.constant 0 : i32
    %c0_i32_1 = arith.constant 0 : i32
    return %arg0, %c0_i32, %c0_i32_0 : i32, i32, i32
  }
  func.func @transform_1(%arg0: i32, %arg1: i32) -> (i32, i32, i32) {
    %c0_i32 = arith.constant 0 : i32
    %c0_i32_0 = arith.constant 0 : i32
    return %arg0, %c0_i32, %arg1 : i32, i32, i32
  }
  func.func @transform_2(%arg0: i32, %arg1: i32) -> (i32, i32, i32) {
    %c0_i32 = arith.constant 0 : i32
    %c0_i32_0 = arith.constant 0 : i32
    return %arg0, %c0_i32, %arg1 : i32, i32, i32
  }
  func.func @transform_3(%arg0: i32, %arg1: i32) -> (i32, i32, i32) {
    %c0_i32 = arith.constant 0 : i32
    %c0_i32_0 = arith.constant 0 : i32
    return %arg0, %c0_i32, %arg1 : i32, i32, i32
  }
  func.func @transform_4(%arg0: i32, %arg1: i32) -> (i32, i32, i32, i32) {
    %c0_i32 = arith.constant 0 : i32
    %c0_i32_0 = arith.constant 0 : i32
    %c0_i32_1 = arith.constant 0 : i32
    return %arg0, %arg1, %c0_i32, %c0_i32_0 : i32, i32, i32, i32
  }
  func.func @transform_5(%arg0: i32, %arg1: i32) -> (i32, i32, i32, i32) {
    %c0_i32 = arith.constant 0 : i32
    %c0_i32_0 = arith.constant 0 : i32
    %c0_i32_1 = arith.constant 0 : i32
    return %arg0, %arg1, %c0_i32, %c0_i32_0 : i32, i32, i32, i32
  }
}

</mosaic_0001>

<llo_original>
// kernel: _assign_device.1
$region0: #{_assign_device.1}
  #allocation0 [shape = 'u32[]', space=smem, size = 0x4, offset = 0x4, fixed_abs, tag = 'smem constant byte address 0x4 - core index']
  #allocation1 [shape = 'u32[72,128]{1,0:T(1,128)}', space=vmem, size = 0x9000, scoped, tag = 'internal scratch']
  %s0 = inlined_call_operand.vmem [shape: f32[2,32,5], index: 0, kind: input, shape index: {}]
  %s1 = inlined_call_operand.vmem [shape: f32[2,4,256], index: 1, kind: input, shape index: {}]
  %s2 = inlined_call_operand.hbm [shape: s8[2,32,256], index: 2, kind: output, shape index: {0}]
  %s3 = inlined_call_operand.vmem [shape: f32[2,1,256], index: 3, kind: output, shape index: {1}]
  %s4 = inlined_call_operand.vmem [shape: s32[2,1,32,1], index: 4, kind: output, shape index: {2}]
  %s5 = inlined_call_operand.hbm [shape: f32[2,1,32,1], index: 5, kind: output, shape index: {3}]
  %6 = xla_tuple %s2, %s3, %s4, %s5
  %s7 = sld [smem:[#allocation0]]
  $region65: #{_assign_device.1} parent=0
    _
  %s9 = ssub.s32 1, %s7
  %s10 = scalar_select 0, %s9, %s7
  $region1: #{_assign_device.1} parent=0
    #allocation2 [shape = 'u8[16384]{0}', space=vmem, size = 0x4000, scoped, tag = 'output window, operand 0']
    #allocation3 [shape = 's32[2]{0}', space=sflag, size = 0x8, scoped, tag = 'scoped memory for _assign_device.1']
    #allocation4 [shape = 'u8[32768]{0}', space=vmem, size = 0x8000, scoped, tag = 'output window, operand 3']
    #allocation5 [shape = 's32[2]{0}', space=sflag, size = 0x8, scoped, tag = 'scoped memory for _assign_device.1']
    %11 = vsyncpa [#allocation3], 0
    %s12 = scalar_lea.sflag [#allocation3], 1
    %13 = vsyncpa %s12, 0
    %14 = vsyncpa [#allocation5], 0
    %s15 = scalar_lea.sflag [#allocation5], 1
    %16 = vsyncpa %s15, 0
    loop: start=0, step=1, limit=4
    $region2: #{_assign_device.1} parent=1 // loop_pre_header
      _
    $region3: #{_assign_device.1} parent=1 // loop_header
      %s18 = sphi 0, %s22
      %p19 = scmp.ge.s32.totalorder %s18, 4
      %s25 = sphi 0, %s37
      %s26 = sphi 0, %s33
      %s27 = sphi 0, %s25
      %s28 = sphi 0, %s26
      %s29 = sphi 0, %s27
      %s30 = sphi 0, %s28
      %s40 = sphi 0, %s42
      %s43 = sphi 0, %s40
      %s44 = sphi 0, %s43
      %s60 = sphi 0, %s44
      %s68 = sphi 0, %s70
      %s71 = sphi 0, %s68
      %s72 = sphi 0, %s71
      %s88 = sphi 0, %s72
      %s96 = sphi 0, %s98
      %s99 = sphi 0, %s96
      %s100 = sphi 0, %s99
      %s116 = sphi 0, %s100
      %s124 = sphi 0, %s126
      %s127 = sphi 0, %s124
      %s128 = sphi 0, %s127
      %s144 = sphi 0, %s128
      %s152 = sphi 0, %s154
      %s155 = sphi 0, %s152
      %s156 = sphi 0, %s155
      %s172 = sphi 0, %s156
      %s180 = sphi 0, %s182
      %s183 = sphi 0, %s180
      %s184 = sphi 0, %s183
      %s200 = sphi 0, %s184
    $region4: #{_assign_device.1} parent=1 // loop_header_branch
      %21 = sbr.rel (%p19) target = $region8
    $region5: #{_assign_device.1} parent=1 // loop_body
      %s23 = ssub.s32 %s18, 1
      %s24 = ssub.s32 %s18, 2
      %s31 = sadd.s32 1, %s26
      %p32 = scmp.ge.s32.totalorder %s31, 1
      %s33 = scalar_select %p32, 0, %s31
      %s34 = sadd.s32 1, %s25
      %s35 = scalar_select %p32, %s34, %s25
      %p36 = scmp.ge.s32.totalorder %s35, 2
      %s37 = scalar_select %p36, 0, %s35
      %s38 = ssub.s32 %s25, %s37
      %p39 = scmp.eq.s32.totalorder %s38, 0
      %s41 = sadd.s32 %s40, 1
      %s42 = scalar_select %p39, %s40, %s41
      %p45 = pneg %p39
      %p46 = scmp.eq.s32.totalorder %s18, 1
      %p47 = por %p45, %p46
      %p48 = scmp.ne.s32.totalorder %s40, %s43
      %p49 = scmp.eq.s32.totalorder %s18, 0
      %p50 = por %p48, %p49
      %p51 = scmp.ne.s32.totalorder %s40, %s43
      %p52 = scmp.eq.s32.totalorder %s23, 1
      %p53 = por %p51, %p52
      %p54 = scmp.ne.s32.totalorder %s43, %s44
      %p55 = scmp.eq.s32.totalorder %s23, 0
      %p56 = por %p54, %p55
      %p57 = scmp.ne.s32.totalorder %s43, %s44
      %p58 = scmp.eq.s32.totalorder %s24, 1
      %p59 = por %p57, %p58
      %p61 = scmp.ne.s32.totalorder %s44, %s60
      %p62 = scmp.eq.s32.totalorder %s24, 0
      %p63 = por %p61, %p62
      %s64 = ssub.s32 %s25, %s37
      %s65 = ssub.s32 %s26, %s33
      %s66 = sor.u32 %s64, %s65
      %p67 = scmp.eq.s32.totalorder %s66, 0
      %s69 = sadd.s32 %s68, 1
      %s70 = scalar_select %p67, %s68, %s69
      %p73 = pneg %p67
      %p74 = scmp.eq.s32.totalorder %s18, 1
      %p75 = por %p73, %p74
      %p76 = scmp.ne.s32.totalorder %s68, %s71
      %p77 = scmp.eq.s32.totalorder %s18, 0
      %p78 = por %p76, %p77
      %p79 = scmp.ne.s32.totalorder %s68, %s71
      %p80 = scmp.eq.s32.totalorder %s23, 1
      %p81 = por %p79, %p80
      %p82 = scmp.ne.s32.totalorder %s71, %s72
      %p83 = scmp.eq.s32.totalorder %s23, 0
      %p84 = por %p82, %p83
      %p85 = scmp.ne.s32.totalorder %s71, %s72
      %p86 = scmp.eq.s32.totalorder %s24, 1
      %p87 = por %p85, %p86
      %p89 = scmp.ne.s32.totalorder %s72, %s88
      %p90 = scmp.eq.s32.totalorder %s24, 0
      %p91 = por %p89, %p90
      %s92 = ssub.s32 %s25, %s37
      %s93 = ssub.s32 %s26, %s33
      %s94 = sor.u32 %s92, %s93
      %p95 = scmp.eq.s32.totalorder %s94, 0
      %s97 = sadd.s32 %s96, 1
      %s98 = scalar_select %p95, %s96, %s97
      %p101 = pneg %p95
      %p102 = scmp.eq.s32.totalorder %s18, 1
      %p103 = por %p101, %p102
      %p104 = scmp.ne.s32.totalorder %s96, %s99
      %p105 = scmp.eq.s32.totalorder %s18, 0
      %p106 = por %p104, %p105
      %p107 = scmp.ne.s32.totalorder %s96, %s99
      %p108 = scmp.eq.s32.totalorder %s23, 1
      %p109 = por %p107, %p108
      %p110 = scmp.ne.s32.totalorder %s99, %s100
      %p111 = scmp.eq.s32.totalorder %s23, 0
      %p112 = por %p110, %p111
      %p113 = scmp.ne.s32.totalorder %s99, %s100
      %p114 = scmp.eq.s32.totalorder %s24, 1
      %p115 = por %p113, %p114
      %p117 = scmp.ne.s32.totalorder %s100, %s116
      %p118 = scmp.eq.s32.totalorder %s24, 0
      %p119 = por %p117, %p118
      %s120 = ssub.s32 %s25, %s37
      %s121 = ssub.s32 %s26, %s33
      %s122 = sor.u32 %s120, %s121
      %p123 = scmp.eq.s32.totalorder %s122, 0
      %s125 = sadd.s32 %s124, 1
      %s126 = scalar_select %p123, %s124, %s125
      %p129 = pneg %p123
      %p130 = scmp.eq.s32.totalorder %s18, 1
      %p131 = por %p129, %p130
      %p132 = scmp.ne.s32.totalorder %s124, %s127
      %p133 = scmp.eq.s32.totalorder %s18, 0
      %p134 = por %p132, %p133
      %p135 = scmp.ne.s32.totalorder %s124, %s127
      %p136 = scmp.eq.s32.totalorder %s23, 1
      %p137 = por %p135, %p136
      %p138 = scmp.ne.s32.totalorder %s127, %s128
      %p139 = scmp.eq.s32.totalorder %s23, 0
      %p140 = por %p138, %p139
      %p141 = scmp.ne.s32.totalorder %s127, %s128
      %p142 = scmp.eq.s32.totalorder %s24, 1
      %p143 = por %p141, %p142
      %p145 = scmp.ne.s32.totalorder %s128, %s144
      %p146 = scmp.eq.s32.totalorder %s24, 0
      %p147 = por %p145, %p146
      %s148 = ssub.s32 %s25, %s37
      %s149 = ssub.s32 %s26, %s33
      %s150 = sor.u32 %s148, %s149
      %p151 = scmp.eq.s32.totalorder %s150, 0
      %s153 = sadd.s32 %s152, 1
      %s154 = scalar_select %p151, %s152, %s153
      %p157 = pneg %p151
      %p158 = scmp.eq.s32.totalorder %s18, 1
      %p159 = por %p157, %p158
      %p160 = scmp.ne.s32.totalorder %s152, %s155
      %p161 = scmp.eq.s32.totalorder %s18, 0
      %p162 = por %p160, %p161
      %p163 = scmp.ne.s32.totalorder %s152, %s155
      %p164 = scmp.eq.s32.totalorder %s23, 1
      %p165 = por %p163, %p164
      %p166 = scmp.ne.s32.totalorder %s155, %s156
      %p167 = scmp.eq.s32.totalorder %s23, 0
      %p168 = por %p166, %p167
      %p169 = scmp.ne.s32.totalorder %s155, %s156
      %p170 = scmp.eq.s32.totalorder %s24, 1
      %p171 = por %p169, %p170
      %p173 = scmp.ne.s32.totalorder %s156, %s172
      %p174 = scmp.eq.s32.totalorder %s24, 0
      %p175 = por %p173, %p174
      %s176 = ssub.s32 %s25, %s37
      %s177 = ssub.s32 %s26, %s33
      %s178 = sor.u32 %s176, %s177
      %p179 = scmp.eq.s32.totalorder %s178, 0
      %s181 = sadd.s32 %s180, 1
      %s182 = scalar_select %p179, %s180, %s181
      %p185 = pneg %p179
      %p186 = scmp.eq.s32.totalorder %s18, 1
      %p187 = por %p185, %p186
      %p188 = scmp.ne.s32.totalorder %s180, %s183
      %p189 = scmp.eq.s32.totalorder %s18, 0
      %p190 = por %p188, %p189
      %p191 = scmp.ne.s32.totalorder %s180, %s183
      %p192 = scmp.eq.s32.totalorder %s23, 1
      %p193 = por %p191, %p192
      %p194 = scmp.ne.s32.totalorder %s183, %s184
      %p195 = scmp.eq.s32.totalorder %s23, 0
      %p196 = por %p194, %p195
      %p197 = scmp.ne.s32.totalorder %s183, %s184
      %p198 = scmp.eq.s32.totalorder %s24, 1
      %p199 = por %p197, %p198
      %p201 = scmp.ne.s32.totalorder %s184, %s200
      %p202 = scmp.eq.s32.totalorder %s24, 0
      %p203 = por %p201, %p202
      %p204 = scmp.le.s32.totalorder 1, %s18
      %p205 = scmp.lt.s32.totalorder %s18, 3
      %p206 = pnand %p204, %p205
      %p207 = pneg %p206
      // Predicated region
      $region9: #{_assign_device.1} parent=5 // pred_check
        _
      $region10: #{_assign_device.1} parent=5 // pred_check_branch
        %209 = sbr.rel (%p206) target = $region12
      $region11: #{_assign_device.1} parent=5 // pred_region
        %s210 = ssub.s32 %s18, 1
      $region12: #{_assign_device.1} parent=5 // pred_fallthru
        _
      %p211 = scmp.lt.s32.totalorder %s18, 2
      // Predicated region
      $region13: #{_assign_device.1} parent=5 // pred_check
        %p212 = pneg %p211
      $region14: #{_assign_device.1} parent=5 // pred_check_branch
        %214 = sbr.rel (%p212) target = $region16
      $region15: #{_assign_device.1} parent=5 // pred_region
        // Predicated region
        $region17: #{_assign_device.1} parent=15 // pred_check
          %p215 = pneg %p50
        $region18: #{_assign_device.1} parent=15 // pred_check_branch
          %217 = sbr.rel (%p215) target = $region20
        $region19: #{_assign_device.1} parent=15 // pred_region
          %p218 = scmp.lt.s32.totalorder %s25, 1
          %s219 = scalar_select %p218, %s25, 1
          %s220 = smul.addr %s219, 4
          %s221 = smul.addr %s220, 8
          %s222 = scalar_lea.vmem %s0, %s221
        $region20: #{_assign_device.1} parent=15 // pred_fallthru
          _
        // Predicated region
        $region21: #{_assign_device.1} parent=15 // pred_check
          %p223 = pneg %p78
        $region22: #{_assign_device.1} parent=15 // pred_check_branch
          %225 = sbr.rel (%p223) target = $region24
        $region23: #{_assign_device.1} parent=15 // pred_region
          %s226 = smul.u32 2, %s26
          %p227 = scmp.lt.s32.totalorder %s25, 1
          %s228 = scalar_select %p227, %s25, 1
          %p229 = scmp.lt.s32.totalorder %s226, 1
          %s230 = scalar_select %p229, %s226, 1
          %s231 = smul.addr %s228, 2
          %s232 = sadd.s32 %s230, %s231
          %s233 = smul.addr %s232, 4
          %s234 = scalar_lea.vmem %s1, %s233
          %s235 = smul.u32 2, %s26
        $region24: #{_assign_device.1} parent=15 // pred_fallthru
          _
      $region16: #{_assign_device.1} parent=5 // pred_fallthru
        _
      %p236 = scmp.le.s32.totalorder 1, %s18
      %p237 = scmp.lt.s32.totalorder %s18, 3
      %p238 = pnand %p236, %p237
      %p239 = pneg %p238
      // Predicated region
      $region25: #{_assign_device.1} parent=5 // pred_check
        _
      $region26: #{_assign_device.1} parent=5 // pred_check_branch
        %241 = sbr.rel (%p238) target = $region28
      $region27: #{_assign_device.1} parent=5 // pred_region
        %s242 = ssub.s32 %s18, 1
        %p243 = scmp.lt.s32.totalorder %s27, 1
        %s244 = scalar_select %p243, %s27, 1
        %s245 = smul.addr %s244, 4
        %s246 = smul.addr %s245, 8
        %s247 = scalar_lea.vmem %s0, %s246
        %p248 = pneg %p56
        %p249 = pneg %p53
        %s250 = smul.u32 2, %s28
        %p251 = scmp.lt.s32.totalorder %s27, 1
        %s252 = scalar_select %p251, %s27, 1
        %p253 = scmp.lt.s32.totalorder %s250, 1
        %s254 = scalar_select %p253, %s250, 1
        %s255 = smul.addr %s252, 2
        %s256 = sadd.s32 %s254, %s255
        %s257 = smul.addr %s256, 4
        %s258 = scalar_lea.vmem %s1, %s257
        %p259 = pneg %p84
        %p260 = pneg %p81
        %p261 = pneg %p112
        %p262 = pneg %p109
        %s263 = sand.u32 %s99, 1
        %s264 = scalar_lea.sflag [#allocation3], %s263
        %s265 = sand.u32 %s99, 1
        %s266 = smul.addr %s265, 16
        %s267 = scalar_lea.vmem [#allocation2], %s266
        %p268 = pneg %p140
        %p269 = pneg %p137
        %s270 = smul.u32 2, %s28
        %p271 = scmp.lt.s32.totalorder %s27, 1
        %s272 = scalar_select %p271, %s27, 1
        %p273 = scmp.lt.s32.totalorder %s270, 1
        %s274 = scalar_select %p273, %s270, 1
        %s275 = smul.addr %s272, 2
        %s276 = sadd.s32 %s274, %s275
        %s277 = scalar_lea.vmem %s3, %s276
        %p278 = pneg %p168
        %p279 = pneg %p165
        %p280 = scmp.lt.s32.totalorder %s27, 1
        %s281 = scalar_select %p280, %s27, 1
        %p282 = scmp.lt.s32.totalorder %s28, 0
        %s283 = scalar_select %p282, %s28, 0
        %s284 = smul.addr %s283, 4
        %s285 = smul.addr %s281, 4
        %s286 = sadd.s32 %s284, %s285
        %s287 = smul.addr %s286, 8
        %s288 = scalar_lea.vmem %s4, %s287
        %p289 = pneg %p196
        %p290 = pneg %p193
        %s291 = sand.u32 %s183, 1
        %s292 = scalar_lea.sflag [#allocation5], %s291
        %s293 = sand.u32 %s183, 1
        %s294 = smul.addr %s293, 32
        %s295 = scalar_lea.vmem [#allocation4], %s294
        %p296 = scmp.lt.s32.totalorder %s27, 1
        %s297 = scalar_select %p296, %s27, 1
        %s298 = smul.addr %s297, 4
        %s299 = smul.addr %s298, 8
        %s300 = scalar_lea.vmem %s0, %s299
        %s301 = smul.u32 2, %s28
        %p302 = scmp.lt.s32.totalorder %s27, 1
        %s303 = scalar_select %p302, %s27, 1
        %p304 = scmp.lt.s32.totalorder %s301, 1
        %s305 = scalar_select %p304, %s301, 1
        %s306 = smul.addr %s303, 2
        %s307 = sadd.s32 %s305, %s306
        %s308 = smul.addr %s307, 4
        %s309 = scalar_lea.vmem %s1, %s308
        %s310 = smul.u32 2, %s28
        %s311 = smul.u32 2, %s28
        %s312 = smul.u32 2, %s28
        %p313 = scmp.lt.s32.totalorder %s27, 1
        %s314 = scalar_select %p313, %s27, 1
        %p315 = scmp.lt.s32.totalorder %s312, 1
        %s316 = scalar_select %p315, %s312, 1
        %s317 = smul.addr %s314, 2
        %s318 = sadd.s32 %s316, %s317
        %s319 = scalar_lea.vmem %s3, %s318
        %s320 = smul.u32 2, %s28
        %p321 = scmp.lt.s32.totalorder %s27, 1
        %s322 = scalar_select %p321, %s27, 1
        %p323 = scmp.lt.s32.totalorder %s28, 0
        %s324 = scalar_select %p323, %s28, 0
        %s325 = smul.addr %s324, 4
        %s326 = smul.addr %s322, 4
        %s327 = sadd.s32 %s325, %s326
        %s328 = smul.addr %s327, 8
        %s329 = scalar_lea.vmem %s4, %s328
        %v332 = vld [vmem:[%s300] sm:$0xff]
        %v333 = vld [vmem:[%s300 + $0x8] sm:$0xff]
        %v334 = vld [vmem:[%s300 + $0x10] sm:$0xff]
        %v335 = vld [vmem:[%s300 + $0x18] sm:$0xff]
        %v336 = vlaneseq
        %v337 = vand.u32 %v336, 127
        %v338 = vadd.s32 %v337, 128
        %v339 = vld [vmem:[%s309] sm:$0xff]
        %v340 = vmul.f32 %v339, 0.5
        %v342 = vrot.slane %v340, 6
        %v343 = vrot.slane %v342, 4
        %v345 = vsub.f32 %v339, %v343
        %v346 = vadd.f32 %v339, %v343
        %v347 = vsub.f32 %v346, %v345
        %v349 = vrot.slane %v347, 5
        %v350 = vrot.slane %v349, 4
        %v352 = vmul.f32 %v347, %v350
        %354 = vset.pattern.permute.xlu0 2
        %355 = vperm.xlu0 %354, %v332
        %v356 = vpop.permute.xlu0 %355
        %359 = vset.pattern.permute.xlu0 2
        %360 = vperm.xlu0 %359, %v333
        %v361 = vpop.permute.xlu0 %360
        %364 = vset.pattern.permute.xlu0 2
        %365 = vperm.xlu0 %364, %v334
        %v366 = vpop.permute.xlu0 %365
        %369 = vset.pattern.permute.xlu0 2
        %370 = vperm.xlu0 %369, %v335
        %v371 = vpop.permute.xlu0 %370
        %v374 = vperm.slane %v346, 0
        %v375 = vperm.slane %v346, 4
        %v378 = vperm.slane %v374, 0
        %v379 = vperm.slane %v375, 0
        %v380 = vmin.f32 %v356, %v378
        %v381 = vmin.f32 %v356, %v379
        %v382 = vmin.f32 %v361, %v378
        %v383 = vmin.f32 %v361, %v379
        %v384 = vmin.f32 %v366, %v378
        %v385 = vmin.f32 %v366, %v379
        %v386 = vmin.f32 %v371, %v378
        %v387 = vmin.f32 %v371, %v379
        %388 = vset.pattern.permute.xlu0 0
        %389 = vperm.xlu0 %388, %v332
        %v390 = vpop.permute.xlu0 %389
        %392 = vset.pattern.permute.xlu0 0
        %393 = vperm.xlu0 %392, %v333
        %v394 = vpop.permute.xlu0 %393
        %396 = vset.pattern.permute.xlu0 0
        %397 = vperm.xlu0 %396, %v334
        %v398 = vpop.permute.xlu0 %397
        %400 = vset.pattern.permute.xlu0 0
        %401 = vperm.xlu0 %400, %v335
        %v402 = vpop.permute.xlu0 %401
        %v405 = vperm.slane %v345, 0
        %v406 = vperm.slane %v345, 4
        %v409 = vperm.slane %v405, 0
        %v410 = vperm.slane %v406, 0
        %v411 = vmax.f32 %v390, %v409
        %v412 = vmax.f32 %v390, %v410
        %v413 = vmax.f32 %v394, %v409
        %v414 = vmax.f32 %v394, %v410
        %v415 = vmax.f32 %v398, %v409
        %v416 = vmax.f32 %v398, %v410
        %v417 = vmax.f32 %v402, %v409
        %v418 = vmax.f32 %v402, %v410
        %v419 = vsub.f32 %v380, %v411
        %v420 = vsub.f32 %v381, %v412
        %v421 = vsub.f32 %v382, %v413
        %v422 = vsub.f32 %v383, %v414
        %v423 = vsub.f32 %v384, %v415
        %v424 = vsub.f32 %v385, %v416
        %v425 = vsub.f32 %v386, %v417
        %v426 = vsub.f32 %v387, %v418
        %v427 = vmax.f32 %v419, 0.0
        %v428 = vmax.f32 %v420, 0.0
        %v429 = vmax.f32 %v421, 0.0
        %v430 = vmax.f32 %v422, 0.0
        %v431 = vmax.f32 %v423, 0.0
        %v432 = vmax.f32 %v424, 0.0
        %v433 = vmax.f32 %v425, 0.0
        %v434 = vmax.f32 %v426, 0.0
        %435 = vset.pattern.permute.xlu0 3
        %436 = vperm.xlu0 %435, %v332
        %v437 = vpop.permute.xlu0 %436
        %439 = vset.pattern.permute.xlu0 3
        %440 = vperm.xlu0 %439, %v333
        %v441 = vpop.permute.xlu0 %440
        %443 = vset.pattern.permute.xlu0 3
        %444 = vperm.xlu0 %443, %v334
        %v445 = vpop.permute.xlu0 %444
        %447 = vset.pattern.permute.xlu0 3
        %448 = vperm.xlu0 %447, %v335
        %v449 = vpop.permute.xlu0 %448
        %v451 = vperm.slane %v346, 1
        %v452 = vperm.slane %v346, 5
        %v455 = vperm.slane %v451, 1
        %v456 = vperm.slane %v452, 1
        %v457 = vmin.f32 %v437, %v455
        %v458 = vmin.f32 %v437, %v456
        %v459 = vmin.f32 %v441, %v455
        %v460 = vmin.f32 %v441, %v456
        %v461 = vmin.f32 %v445, %v455
        %v462 = vmin.f32 %v445, %v456
        %v463 = vmin.f32 %v449, %v455
        %v464 = vmin.f32 %v449, %v456
        %465 = vset.pattern.permute.xlu0 1
        %466 = vperm.xlu0 %465, %v332
        %v467 = vpop.permute.xlu0 %466
        %469 = vset.pattern.permute.xlu0 1
        %470 = vperm.xlu0 %469, %v333
        %v471 = vpop.permute.xlu0 %470
        %473 = vset.pattern.permute.xlu0 1
        %474 = vperm.xlu0 %473, %v334
        %v475 = vpop.permute.xlu0 %474
        %477 = vset.pattern.permute.xlu0 1
        %478 = vperm.xlu0 %477, %v335
        %v479 = vpop.permute.xlu0 %478
        %v481 = vperm.slane %v345, 1
        %v482 = vperm.slane %v345, 5
        %v485 = vperm.slane %v481, 1
        %v486 = vperm.slane %v482, 1
        %v487 = vmax.f32 %v467, %v485
        %v488 = vmax.f32 %v467, %v486
        %v489 = vmax.f32 %v471, %v485
        %v490 = vmax.f32 %v471, %v486
        %v491 = vmax.f32 %v475, %v485
        %v492 = vmax.f32 %v475, %v486
        %v493 = vmax.f32 %v479, %v485
        %v494 = vmax.f32 %v479, %v486
        %v495 = vsub.f32 %v457, %v487
        %v496 = vsub.f32 %v458, %v488
        %v497 = vsub.f32 %v459, %v489
        %v498 = vsub.f32 %v460, %v490
        %v499 = vsub.f32 %v461, %v491
        %v500 = vsub.f32 %v462, %v492
        %v501 = vsub.f32 %v463, %v493
        %v502 = vsub.f32 %v464, %v494
        %v503 = vmax.f32 %v495, 0.0
        %v504 = vmax.f32 %v496, 0.0
        %v505 = vmax.f32 %v497, 0.0
        %v506 = vmax.f32 %v498, 0.0
        %v507 = vmax.f32 %v499, 0.0
        %v508 = vmax.f32 %v500, 0.0
        %v509 = vmax.f32 %v501, 0.0
        %v510 = vmax.f32 %v502, 0.0
        %v511 = vmul.f32 %v427, %v503
        %v512 = vmul.f32 %v428, %v504
        %v513 = vmul.f32 %v429, %v505
        %v514 = vmul.f32 %v430, %v506
        %v515 = vmul.f32 %v431, %v507
        %v516 = vmul.f32 %v432, %v508
        %v517 = vmul.f32 %v433, %v509
        %v518 = vmul.f32 %v434, %v510
        %519 = vset.pattern.permute.xlu0 4
        %520 = vperm.xlu0 %519, %v332
        %v521 = vpop.permute.xlu0 %520
        %523 = vset.pattern.permute.xlu0 4
        %524 = vperm.xlu0 %523, %v333
        %v525 = vpop.permute.xlu0 %524
        %527 = vset.pattern.permute.xlu0 4
        %528 = vperm.xlu0 %527, %v334
        %v529 = vpop.permute.xlu0 %528
        %531 = vset.pattern.permute.xlu0 4
        %532 = vperm.xlu0 %531, %v335
        %v533 = vpop.permute.xlu0 %532
        %v536 = vperm.slane %v352, 0
        %v537 = vperm.slane %v352, 4
        %v540 = vperm.slane %v536, 0
        %v541 = vperm.slane %v537, 0
        %v542 = vadd.f32 %v521, %v540
        %v543 = vadd.f32 %v521, %v541
        %v544 = vadd.f32 %v525, %v540
        %v545 = vadd.f32 %v525, %v541
        %v546 = vadd.f32 %v529, %v540
        %v547 = vadd.f32 %v529, %v541
        %v548 = vadd.f32 %v533, %v540
        %v549 = vadd.f32 %v533, %v541
        %v550 = vsub.f32 %v542, %v511
        %v551 = vsub.f32 %v543, %v512
        %v552 = vsub.f32 %v544, %v513
        %v553 = vsub.f32 %v545, %v514
        %v554 = vsub.f32 %v546, %v515
        %v555 = vsub.f32 %v547, %v516
        %v556 = vsub.f32 %v548, %v517
        %v557 = vsub.f32 %v549, %v518
        %v558 = vmul.f32 %v550, 0.7
        %v559 = vmul.f32 %v551, 0.7
        %v560 = vmul.f32 %v552, 0.7
        %v561 = vmul.f32 %v553, 0.7
        %v562 = vmul.f32 %v554, 0.7
        %v563 = vmul.f32 %v555, 0.7
        %v564 = vmul.f32 %v556, 0.7
        %v565 = vmul.f32 %v557, 0.7
        %vm566 = vcmp.gt.f32.partialorder %v511, %v558
        %vm567 = vcmp.gt.f32.partialorder %v512, %v559
        %vm568 = vcmp.gt.f32.partialorder %v513, %v560
        %vm569 = vcmp.gt.f32.partialorder %v514, %v561
        %vm570 = vcmp.gt.f32.partialorder %v515, %v562
        %vm571 = vcmp.gt.f32.partialorder %v516, %v563
        %vm572 = vcmp.gt.f32.partialorder %v517, %v564
        %vm573 = vcmp.gt.f32.partialorder %v518, %v565
        %vm574 = vmpackc.low %vm568, %vm566
        %vm575 = vmpackc.low %vm572, %vm570
        %v576 = vsel %vm574, 16711935, 0
        %v577 = vsel %vm575, 16711935, 0
        %v578 = vpack.c.b8 %v577, %v576
        %vm579 = vnez %v578
        %vm580 = vmpackc.low %vm569, %vm567
        %vm581 = vmpackc.low %vm573, %vm571
        %v582 = vsel %vm580, 16711935, 0
        %v583 = vsel %vm581, 16711935, 0
        %v584 = vpack.c.b8 %v583, %v582
        %vm585 = vnez %v584
        %v586 = vsel %vm579, 16843009, 0
        %v587 = vsel %vm585, 16843009, 0
        %588 = vst [vmem:[%s267] sm:$0xff] %v586
        %589 = vst [vmem:[%s267 + $0x8] sm:$0xff] %v587
        %v590 = vrcp.pop %v550
        %v591 = vrcp.pop %v551
        %v592 = vrcp.pop %v552
        %v593 = vrcp.pop %v553
        %v594 = vrcp.pop %v554
        %v595 = vrcp.pop %v555
        %v596 = vrcp.pop %v556
        %v597 = vrcp.pop %v557
        %v598 = vmul.f32 %v511, %v590
        %v599 = vmul.f32 %v512, %v591
        %v600 = vmul.f32 %v513, %v592
        %v601 = vmul.f32 %v514, %v593
        %v602 = vmul.f32 %v515, %v594
        %v603 = vmul.f32 %v516, %v595
        %v604 = vmul.f32 %v517, %v596
        %v605 = vmul.f32 %v518, %v597
        %v606 = vmax.f32 %v598, %v602
        %v607 = vmax.f32 %v600, %v604
        %v608 = vmax.f32 %v606, %v607
        %v609 = vrot.slane %v608, 4
        %v610 = vmax.f32 %v608, %v609
        %v611 = vrot.slane %v610, 2
        %v612 = vmax.f32 %v610, %v611
        %v613 = vrot.slane %v612, 1
        %v614 = vmax.f32 %v612, %v613
        %v615 = vmax.f32 %v599, %v603
        %v616 = vmax.f32 %v601, %v605
        %v617 = vmax.f32 %v615, %v616
        %v618 = vrot.slane %v617, 4
        %v619 = vmax.f32 %v617, %v618
        %v620 = vrot.slane %v619, 2
        %v621 = vmax.f32 %v619, %v620
        %v622 = vrot.slane %v621, 1
        %v623 = vmax.f32 %v621, %v622
        %v626 = vrot.slane %v623, 7
        %vm627 = vcmask 1040384
        %v628 = vsel %vm627, %v614, %v626
        %v630 = vlaneseq
        %vm631 = vcmp.ge.s32.totalorder %v630, 0
        %vm632 = vcmp.lt.s32.totalorder %v630, 256
        %vm633 = vmand %vm631, %vm632
        %634 = vst.msk [vmem:[%s319] sm:$0x3] %vm633, %v628
        %v635 = vmax.f32 %v598, %v599
        %636 = vmax.xlane.f32.xlu0 %v635
        %v637 = vpop.xlane.xlu0 %636
        %v638 = vmax.f32 %v600, %v601
        %639 = vmax.xlane.f32.xlu0 %v638
        %v640 = vpop.xlane.xlu0 %639
        %v641 = vmax.f32 %v602, %v603
        %642 = vmax.xlane.f32.xlu0 %v641
        %v643 = vpop.xlane.xlu0 %642
        %v644 = vmax.f32 %v604, %v605
        %645 = vmax.xlane.f32.xlu0 %v644
        %v646 = vpop.xlane.xlu0 %645
        %vm647 = vcmp.eq.f32.partialorder %v598, %v637
        %vm648 = vcmp.eq.f32.partialorder %v599, %v637
        %vm649 = vcmp.eq.f32.partialorder %v600, %v640
        %vm650 = vcmp.eq.f32.partialorder %v601, %v640
        %vm651 = vcmp.eq.f32.partialorder %v602, %v643
        %vm652 = vcmp.eq.f32.partialorder %v603, %v643
        %vm653 = vcmp.eq.f32.partialorder %v604, %v646
        %vm654 = vcmp.eq.f32.partialorder %v605, %v646
        %v655 = vsel %vm647, %v337, 256
        %v656 = vsel %vm648, %v338, 256
        %v657 = vsel %vm649, %v337, 256
        %v658 = vsel %vm650, %v338, 256
        %v659 = vsel %vm651, %v337, 256
        %v660 = vsel %vm652, %v338, 256
        %v661 = vsel %vm653, %v337, 256
        %v662 = vsel %vm654, %v338, 256
        %vm663 = vcmp.lt.s32.totalorder %v655, %v656
        %v664 = vsel %vm663, %v655, %v656
        %v665 = vand.u32 %v664, 65535
        %v666 = vshra.s32 %v664, 16
        %v667 = vcvt.s32.f32 %v665
        %v668 = vcvt.s32.f32 %v666
        %669 = vmin.xlane.f32.xlu0 %v668
        %v670 = vpop.xlane.xlu0 %669
        %vm671 = vcmp.eq.f32.partialorder %v668, %v670
        %v672 = vsel %vm671, %v667, inf
        %673 = vmin.xlane.f32.xlu0 %v672
        %v674 = vpop.xlane.xlu0 %673
        %v675 = vcvt.f32.s32 %v674
        %v676 = vcvt.f32.s32 %v670
        %v677 = vshll.u32 %v676, 16
        %v678 = vadd.s32 %v677, %v675
        %vm679 = vcmp.lt.s32.totalorder %v657, %v658
        %v680 = vsel %vm679, %v657, %v658
        %v681 = vand.u32 %v680, 65535
        %v682 = vshra.s32 %v680, 16
        %v683 = vcvt.s32.f32 %v681
        %v684 = vcvt.s32.f32 %v682
        %685 = vmin.xlane.f32.xlu0 %v684
        %v686 = vpop.xlane.xlu0 %685
        %vm687 = vcmp.eq.f32.partialorder %v684, %v686
        %v688 = vsel %vm687, %v683, inf
        %689 = vmin.xlane.f32.xlu0 %v688
        %v690 = vpop.xlane.xlu0 %689
        %v691 = vcvt.f32.s32 %v690
        %v692 = vcvt.f32.s32 %v686
        %v693 = vshll.u32 %v692, 16
        %v694 = vadd.s32 %v693, %v691
        %vm695 = vcmp.lt.s32.totalorder %v659, %v660
        %v696 = vsel %vm695, %v659, %v660
        %v697 = vand.u32 %v696, 65535
        %v698 = vshra.s32 %v696, 16
        %v699 = vcvt.s32.f32 %v697
        %v700 = vcvt.s32.f32 %v698
        %701 = vmin.xlane.f32.xlu0 %v700
        %v702 = vpop.xlane.xlu0 %701
        %vm703 = vcmp.eq.f32.partialorder %v700, %v702
        %v704 = vsel %vm703, %v699, inf
        %705 = vmin.xlane.f32.xlu0 %v704
        %v706 = vpop.xlane.xlu0 %705
        %v707 = vcvt.f32.s32 %v706
        %v708 = vcvt.f32.s32 %v702
        %v709 = vshll.u32 %v708, 16
        %v710 = vadd.s32 %v709, %v707
        %vm711 = vcmp.lt.s32.totalorder %v661, %v662
        %v712 = vsel %vm711, %v661, %v662
        %v713 = vand.u32 %v712, 65535
        %v714 = vshra.s32 %v712, 16
        %v715 = vcvt.s32.f32 %v713
        %v716 = vcvt.s32.f32 %v714
        %717 = vmin.xlane.f32.xlu0 %v716
        %v718 = vpop.xlane.xlu0 %717
        %vm719 = vcmp.eq.f32.partialorder %v716, %v718
        %v720 = vsel %vm719, %v715, inf
        %721 = vmin.xlane.f32.xlu0 %v720
        %v722 = vpop.xlane.xlu0 %721
        %v723 = vcvt.f32.s32 %v722
        %v724 = vcvt.f32.s32 %v718
        %v725 = vshll.u32 %v724, 16
        %v726 = vadd.s32 %v725, %v723
        %v727 = vstv 0
        %v728 = vadd.s32 %v678, %v727
        %v729 = vadd.s32 %v694, %v727
        %v730 = vadd.s32 %v710, %v727
        %v731 = vadd.s32 %v726, %v727
        %s732 = smul.u32 %s28, 256
        %v733 = vstv %s732
        %v734 = vadd.s32 %v728, %v733
        %v735 = vadd.s32 %v729, %v733
        %v736 = vadd.s32 %v730, %v733
        %v737 = vadd.s32 %v731, %v733
        %vm738 = vcmp.gt.f32.partialorder %v637, -inf
        %vm739 = vcmp.gt.f32.partialorder %v640, -inf
        %vm740 = vcmp.gt.f32.partialorder %v643, -inf
        %vm741 = vcmp.gt.f32.partialorder %v646, -inf
        %v742 = vsel %vm738, %v637, -inf
        %v743 = vsel %vm739, %v640, -inf
        %v744 = vsel %vm740, %v643, -inf
        %v745 = vsel %vm741, %v646, -inf
        %v746 = vsel %vm738, %v734, 0
        %v747 = vsel %vm739, %v735, 0
        %v748 = vsel %vm740, %v736, 0
        %v749 = vsel %vm741, %v737, 0
        %vm750 = vcmask 7168
        %751 = vst.msk [vmem:[%s329] sm:$0xff] %vm750, %v746
        %752 = vst.msk [vmem:[%s329 + $0x8] sm:$0xff] %vm750, %v747
        %753 = vst.msk [vmem:[%s329 + $0x10] sm:$0xff] %vm750, %v748
        %754 = vst.msk [vmem:[%s329 + $0x18] sm:$0xff] %vm750, %v749
        %755 = vst.msk [vmem:[%s295] sm:$0xff] %vm750, %v742
        %756 = vst.msk [vmem:[%s295 + $0x8] sm:$0xff] %vm750, %v743
        %757 = vst.msk [vmem:[%s295 + $0x10] sm:$0xff] %vm750, %v744
        %758 = vst.msk [vmem:[%s295 + $0x18] sm:$0xff] %vm750, %v745
        %s759 = sand.u32 %s99, 1
        %s760 = scalar_lea.sflag [#allocation3], %s759
        %s761 = sand.u32 %s99, 1
        %s762 = smul.addr %s761, 16
        %s763 = scalar_lea.vmem [#allocation2], %s762
        %s764 = smul.u32 2, %s28
        %p765 = scmp.lt.s32.totalorder %s27, 1
        %s766 = scalar_select %p765, %s27, 1
        %p767 = scmp.lt.s32.totalorder %s764, 1
        %s768 = scalar_select %p767, %s764, 1
        %s769 = smul.addr %s766, 2
        %s770 = sadd.s32 %s768, %s769
        %s771 = scalar_lea.vmem %s3, %s770
        %p772 = scmp.lt.s32.totalorder %s27, 1
        %s773 = scalar_select %p772, %s27, 1
        %p774 = scmp.lt.s32.totalorder %s28, 0
        %s775 = scalar_select %p774, %s28, 0
        %s776 = smul.addr %s775, 4
        %s777 = smul.addr %s773, 4
        %s778 = sadd.s32 %s776, %s777
        %s779 = smul.addr %s778, 8
        %s780 = scalar_lea.vmem %s4, %s779
        %s781 = sand.u32 %s183, 1
        %s782 = scalar_lea.sflag [#allocation5], %s781
        %s783 = sand.u32 %s183, 1
        %s784 = smul.addr %s783, 32
        %s785 = scalar_lea.vmem [#allocation4], %s784
        // Predicated region
        $region29: #{_assign_device.1} parent=27 // pred_check
          %p786 = pneg %p109
        $region30: #{_assign_device.1} parent=27 // pred_check_branch
          %788 = sbr.rel (%p786) target = $region32
        $region31: #{_assign_device.1} parent=27 // pred_region
          %s789 = smul.u32 2, %s28
          %791 = vsyncadd %s760, 0
          %s792 = smul.addr %s27, 2
          %s793 = sadd.s32 %s789, %s792
          %s794 = smul.addr %s793, 8
          %s795 = scalar_lea.hbm %s2, %s794
          %s797 = sshll.u32 %s763, 4
          %s798 = int_to_ptr.vmem [resolvable:$true] %s797
          %s799 = sshll.u32 %s795, 4
          %s800 = int_to_ptr.hbm [resolvable:$true] %s799
          %802 = dma.vmem_to_hbm [thread:$0]  %s798, 256, %s800, %s760
        $region32: #{_assign_device.1} parent=27 // pred_fallthru
          _
        // Predicated region
        $region33: #{_assign_device.1} parent=27 // pred_check
          %p803 = pneg %p137
        $region34: #{_assign_device.1} parent=27 // pred_check_branch
          %805 = sbr.rel (%p803) target = $region36
        $region35: #{_assign_device.1} parent=27 // pred_region
          %s806 = smul.u32 2, %s28
        $region36: #{_assign_device.1} parent=27 // pred_fallthru
          _
        // Predicated region
        $region37: #{_assign_device.1} parent=27 // pred_check
          %p807 = pneg %p165
        $region38: #{_assign_device.1} parent=27 // pred_check_branch
          %809 = sbr.rel (%p807) target = $region40
        $region39: #{_assign_device.1} parent=27 // pred_region
          _
        $region40: #{_assign_device.1} parent=27 // pred_fallthru
          _
        // Predicated region
        $region41: #{_assign_device.1} parent=27 // pred_check
          %p810 = pneg %p193
        $region42: #{_assign_device.1} parent=27 // pred_check_branch
          %812 = sbr.rel (%p810) target = $region44
        $region43: #{_assign_device.1} parent=27 // pred_region
          %814 = vsyncadd %s782, 0
          %s815 = smul.addr %s28, 4
          %s816 = smul.addr %s27, 4
          %s817 = sadd.s32 %s815, %s816
          %s818 = smul.addr %s817, 8
          %s819 = scalar_lea.hbm %s5, %s818
          %s820 = sshll.u32 %s785, 4
          %s821 = int_to_ptr.vmem [resolvable:$true] %s820
          %s822 = sshll.u32 %s819, 4
          %s823 = int_to_ptr.hbm [resolvable:$true] %s822
          %828 = dma.vmem_to_hbm [thread:$0]  %s821, 512, %s823, %s782, 128, 128, 8
        $region44: #{_assign_device.1} parent=27 // pred_fallthru
          _
      $region28: #{_assign_device.1} parent=5 // pred_fallthru
        _
      %p829 = scmp.le.s32.totalorder 2, %s18
      // Predicated region
      $region45: #{_assign_device.1} parent=5 // pred_check
        %p830 = pneg %p829
      $region46: #{_assign_device.1} parent=5 // pred_check_branch
        %832 = sbr.rel (%p830) target = $region48
      $region47: #{_assign_device.1} parent=5 // pred_region
        %s833 = ssub.s32 %s18, 2
        // Predicated region
        $region49: #{_assign_device.1} parent=47 // pred_check
          %p834 = pneg %p115
        $region50: #{_assign_device.1} parent=47 // pred_check_branch
          %836 = sbr.rel (%p834) target = $region52
        $region51: #{_assign_device.1} parent=47 // pred_region
          %s837 = sand.u32 %s100, 1
          %s838 = scalar_lea.sflag [#allocation3], %s837
          %s839 = sand.u32 %s100, 1
          %s840 = smul.addr %s839, 16
          %s841 = scalar_lea.vmem [#allocation2], %s840
          %843 = dma.done %s838, 256
        $region52: #{_assign_device.1} parent=47 // pred_fallthru
          _
        // Predicated region
        $region53: #{_assign_device.1} parent=47 // pred_check
          %p844 = pneg %p143
        $region54: #{_assign_device.1} parent=47 // pred_check_branch
          %846 = sbr.rel (%p844) target = $region56
        $region55: #{_assign_device.1} parent=47 // pred_region
          %s847 = smul.u32 2, %s30
          %p848 = scmp.lt.s32.totalorder %s29, 1
          %s849 = scalar_select %p848, %s29, 1
          %p850 = scmp.lt.s32.totalorder %s847, 1
          %s851 = scalar_select %p850, %s847, 1
          %s852 = smul.addr %s849, 2
          %s853 = sadd.s32 %s851, %s852
          %s854 = scalar_lea.vmem %s3, %s853
        $region56: #{_assign_device.1} parent=47 // pred_fallthru
          _
        // Predicated region
        $region57: #{_assign_device.1} parent=47 // pred_check
          %p855 = pneg %p171
        $region58: #{_assign_device.1} parent=47 // pred_check_branch
          %857 = sbr.rel (%p855) target = $region60
        $region59: #{_assign_device.1} parent=47 // pred_region
          %p858 = scmp.lt.s32.totalorder %s29, 1
          %s859 = scalar_select %p858, %s29, 1
          %p860 = scmp.lt.s32.totalorder %s30, 0
          %s861 = scalar_select %p860, %s30, 0
          %s862 = smul.addr %s861, 4
          %s863 = smul.addr %s859, 4
          %s864 = sadd.s32 %s862, %s863
          %s865 = smul.addr %s864, 8
          %s866 = scalar_lea.vmem %s4, %s865
        $region60: #{_assign_device.1} parent=47 // pred_fallthru
          _
        // Predicated region
        $region61: #{_assign_device.1} parent=47 // pred_check
          %p867 = pneg %p199
        $region62: #{_assign_device.1} parent=47 // pred_check_branch
          %869 = sbr.rel (%p867) target = $region64
        $region63: #{_assign_device.1} parent=47 // pred_region
          %s870 = sand.u32 %s184, 1
          %s871 = scalar_lea.sflag [#allocation5], %s870
          %s872 = sand.u32 %s184, 1
          %s873 = smul.addr %s872, 32
          %s874 = scalar_lea.vmem [#allocation4], %s873
          %876 = dma.done %s871, 512
        $region64: #{_assign_device.1} parent=47 // pred_fallthru
          _
      $region48: #{_assign_device.1} parent=5 // pred_fallthru
        _
    $region6: #{_assign_device.1} parent=1 // loop_footer
      %s22 = sadd.s32 1, %s18
    $region7: #{_assign_device.1} parent=1 // loop_footer_branch
      %17 = sbr.rel target = $region3
    $region8: #{_assign_device.1} parent=1 // loop_exit
      _
    %877 = vsyncpa [#allocation3], 1
    %s878 = scalar_lea.sflag [#allocation3], 1
    %879 = vsyncpa %s878, 1
    %880 = vsyncpa [#allocation5], 1
    %s881 = scalar_lea.sflag [#allocation5], 1
    %882 = vsyncpa %s881, 1

</llo_original>
